<compile_context>
chip_gen: v7x
topology: tpu7x:2x2x1
jax: 0.10.0
libtpu: 0.0.40
codegen_flags: <defaults>
</compile_context>

<pallas_src>
import functools

import jax
import jax.numpy as jnp
from jax import lax
from jax.experimental import pallas as pl
from jax.experimental.pallas import tpu as pltpu


def _tile(dim: int, target: int) -> int:
    """Use `target` if it cleanly divides `dim`, else fall back to the full dim.

    `target` is always chosen as a multiple of (8, 128) where it matters, so the
    returned block shape is either aligned or equals the full array dim.
    """
    if dim > target and dim % target == 0:
        return target
    return dim


# ----------------------------- LayerNorm ------------------------------------
def _layernorm_kernel(x_ref, g_ref, b_ref, o_ref, *, eps):
    x = x_ref[...].astype(jnp.float32)
    mean = jnp.mean(x, axis=-1, keepdims=True)
    xc = x - mean
    var = jnp.mean(xc * xc, axis=-1, keepdims=True)
    inv = lax.rsqrt(var + eps)
    o_ref[...] = (xc * inv * g_ref[...] + b_ref[...]).astype(o_ref.dtype)


def layernorm(x2d, gamma, beta, *, eps=1e-5, row_tile=512):
    M, E = x2d.shape
    tm = _tile(M, row_tile)
    g = gamma.reshape(1, E).astype(jnp.float32)
    b = beta.reshape(1, E).astype(jnp.float32)
    return pl.pallas_call(
        functools.partial(_layernorm_kernel, eps=eps),
        out_shape=jax.ShapeDtypeStruct((M, E), x2d.dtype),
        grid=(M // tm,),
        in_specs=[
            pl.BlockSpec((tm, E), lambda i: (i, 0)),
            pl.BlockSpec((1, E), lambda i: (0, 0)),
            pl.BlockSpec((1, E), lambda i: (0, 0)),
        ],
        out_specs=pl.BlockSpec((tm, E), lambda i: (i, 0)),
        compiler_params=pltpu.CompilerParams(dimension_semantics=("parallel",)),
    )(x2d, g, b)


# ------------------------ Linear (matmul + bias + act) -----------------------
def _linear_kernel(x_ref, w_ref, b_ref, o_ref, acc_ref, *, activation):
    k = pl.program_id(2)

    @pl.when(k == 0)
    def _():
        acc_ref[...] = jnp.zeros_like(acc_ref)

    acc_ref[...] += jnp.dot(
        x_ref[...], w_ref[...], preferred_element_type=jnp.float32
    )

    @pl.when(k == pl.num_programs(2) - 1)
    def _():
        out = acc_ref[...] + b_ref[...].astype(jnp.float32)
        if activation == "relu":
            out = jnp.maximum(out, 0.0)
        o_ref[...] = out.astype(o_ref.dtype)


def linear(x2d, w, b, activation=None, *, tm=256, tn=256, tk=512):
    M, K = x2d.shape
    K2, N = w.shape
    assert K == K2
    tm, tn, tk = _tile(M, tm), _tile(N, tn), _tile(K, tk)
    b2 = b.reshape(1, N)
    return pl.pallas_call(
        functools.partial(_linear_kernel, activation=activation),
        out_shape=jax.ShapeDtypeStruct((M, N), x2d.dtype),
        grid=(M // tm, N // tn, K // tk),
        in_specs=[
            pl.BlockSpec((tm, tk), lambda i, j, k: (i, k)),
            pl.BlockSpec((tk, tn), lambda i, j, k: (k, j)),
            pl.BlockSpec((1, tn), lambda i, j, k: (0, j)),
        ],
        out_specs=pl.BlockSpec((tm, tn), lambda i, j, k: (i, j)),
        scratch_shapes=[pltpu.VMEM((tm, tn), jnp.float32)],
        compiler_params=pltpu.CompilerParams(
            dimension_semantics=("parallel", "parallel", "arbitrary")
        ),
    )(x2d, w, b2)


# ------------------------ Multi-head attention core --------------------------
def _attn_kernel(q_ref, k_ref, v_ref, o_ref, *, scale):
    q = q_ref[0, 0].astype(jnp.float32)   # (T, hs)
    k = k_ref[0, 0].astype(jnp.float32)   # (T, hs)
    v = v_ref[0, 0].astype(jnp.float32)   # (T, hs)
    # s = q @ k^T  (contract last dims; no explicit transpose needed)
    s = lax.dot_general(
        q, k, (((1,), (1,)), ((), ())), preferred_element_type=jnp.float32
    ) * scale
    s = s - jnp.max(s, axis=-1, keepdims=True)
    p = jnp.exp(s)
    p = p / jnp.sum(p, axis=-1, keepdims=True)
    o_ref[0, 0] = jnp.dot(p, v, preferred_element_type=jnp.float32).astype(o_ref.dtype)


def mha_attention(q, k, v):
    # q, k, v: (B, H, T, hs) ; mask=False in the module, so no causal mask.
    # TODO(synk): for long sequences this single-(T,T)-block softmax should be
    # replaced by a flash-attention style KV-tiled kernel; at these sizes the
    # whole head fits comfortably in VMEM.
    B, H, T, hs = q.shape
    scale = 1.0 / (hs ** 0.5)
    spec = pl.BlockSpec((1, 1, T, hs), lambda b, h: (b, h, 0, 0))
    return pl.pallas_call(
        functools.partial(_attn_kernel, scale=scale),
        out_shape=jax.ShapeDtypeStruct((B, H, T, hs), q.dtype),
        grid=(B, H),
        in_specs=[spec, spec, spec],
        out_specs=spec,
        compiler_params=pltpu.CompilerParams(
            dimension_semantics=("parallel", "parallel")
        ),
    )(q, k, v)


# ---------------------------- EncoderLayer / Block ---------------------------
def encoder_layer_forward(x, p, n_heads):
    B, T, E = x.shape
    hs = E // n_heads
    x2 = x.reshape(B * T, E)

    # --- self-attention sub-block (pre-norm) ---
    h = layernorm(x2, p["ln1_g"], p["ln1_b"])
    qkv = linear(h, p["w_qkv"], p["b_qkv"])                      # (B*T, 3E)
    # Match the PyTorch layout: reshape (B,T,H,3*hs) then split q|k|v per head.
    qkv = qkv.reshape(B, T, n_heads, 3 * hs)
    q = jnp.transpose(qkv[..., 0 * hs:1 * hs], (0, 2, 1, 3))     # (B,H,T,hs)
    k = jnp.transpose(qkv[..., 1 * hs:2 * hs], (0, 2, 1, 3))
    v = jnp.transpose(qkv[..., 2 * hs:3 * hs], (0, 2, 1, 3))
    attn = mha_attention(q, k, v)                                # (B,H,T,hs)
    attn = jnp.transpose(attn, (0, 2, 1, 3)).reshape(B * T, E)
    proj = linear(attn, p["w_o"], p["b_o"])
    # TODO(synk): dropout1 is identity (inference/eval semantics).
    x2 = x2 + proj

    # --- feed-forward sub-block (pre-norm) ---
    h2 = layernorm(x2, p["ln2_g"], p["ln2_b"])
    f = linear(h2, p["w_ff1"], p["b_ff1"], activation="relu")
    f = linear(f, p["w_ff2"], p["b_ff2"])
    # TODO(synk): dropout2 is identity (inference/eval semantics).
    x2 = x2 + f
    return x2.reshape(B, T, E)


def encoder_block_forward(x, layer_params, n_heads):
    for p in layer_params:
        x = encoder_layer_forward(x, p, n_heads)
    return x


# ------------------------------ pure-JAX reference ---------------------------
def _reference_encoder_block(x, layer_params, n_heads):
    def ln(z, g, b, eps=1e-5):
        mean = z.mean(-1, keepdims=True)
        var = ((z - mean) ** 2).mean(-1, keepdims=True)
        return (z - mean) / jnp.sqrt(var + eps) * g + b

    B, T, E = x.shape
    hs = E // n_heads
    for p in layer_params:
        h = ln(x, p["ln1_g"], p["ln1_b"])
        qkv = h @ p["w_qkv"] + p["b_qkv"]
        qkv = qkv.reshape(B, T, n_heads, 3 * hs).transpose(0, 2, 1, 3)
        q, k, v = qkv[..., :hs], qkv[..., hs:2 * hs], qkv[..., 2 * hs:]
        y = (q @ jnp.swapaxes(k, -2, -1)) / (hs ** 0.5)
        y = jax.nn.softmax(y, axis=-1)
        vals = (y @ v).transpose(0, 2, 1, 3).reshape(B, T, E)
        x = x + (vals @ p["w_o"] + p["b_o"])
        h2 = ln(x, p["ln2_g"], p["ln2_b"])
        f = jnp.maximum(h2 @ p["w_ff1"] + p["b_ff1"], 0.0) @ p["w_ff2"] + p["b_ff2"]
        x = x + f
    return x


# ----------------------------------- demo ------------------------------------
if __name__ == "__main__":
    B, T, n_embd, n_heads, n_layers = 2, 8, 32, 4, 2

    key = jax.random.PRNGKey(0)
    key, xk = jax.random.split(key)
    x = jax.random.normal(xk, (B, T, n_embd), dtype=jnp.float32)

    layer_params = []
    s = 0.05
    for _ in range(n_layers):
        keys = jax.random.split(key, 13)
        key = keys[0]
        p = dict(
            ln1_g=1.0 + s * jax.random.normal(keys[1], (n_embd,), jnp.float32),
            ln1_b=s * jax.random.normal(keys[2], (n_embd,), jnp.float32),
            w_qkv=s * jax.random.normal(keys[3], (n_embd, 3 * n_embd), jnp.float32),
            b_qkv=s * jax.random.normal(keys[4], (3 * n_embd,), jnp.float32),
            w_o=s * jax.random.normal(keys[5], (n_embd, n_embd), jnp.float32),
            b_o=s * jax.random.normal(keys[6], (n_embd,), jnp.float32),
            ln2_g=1.0 + s * jax.random.normal(keys[7], (n_embd,), jnp.float32),
            ln2_b=s * jax.random.normal(keys[8], (n_embd,), jnp.float32),
            w_ff1=s * jax.random.normal(keys[9], (n_embd, 4 * n_embd), jnp.float32),
            b_ff1=s * jax.random.normal(keys[10], (4 * n_embd,), jnp.float32),
            w_ff2=s * jax.random.normal(keys[11], (4 * n_embd, n_embd), jnp.float32),
            b_ff2=s * jax.random.normal(keys[12], (n_embd,), jnp.float32),
        )
        layer_params.append(p)

    out = encoder_block_forward(x, layer_params, n_heads)
    out = jax.block_until_ready(out)

    ref = _reference_encoder_block(x, layer_params, n_heads)
    assert out.shape == (B, T, n_embd), out.shape
    assert out.dtype == jnp.float32
    max_err = float(jnp.max(jnp.abs(out - ref)))
    assert jnp.allclose(out, ref, atol=1e-4, rtol=1e-4), max_err

    print("KERNEL_OK")
</pallas_src>

<mosaic_0001>
module attributes {stable_mosaic.version = 11 : i64} {
  func.func @_layernorm_kernel(%arg0: i32, %arg1: memref<16x32xf32, #tpu.memory_space<vmem>>, %arg2: memref<1x32xf32, #tpu.memory_space<vmem>>, %arg3: memref<1x32xf32, #tpu.memory_space<vmem>>, %arg4: memref<16x32xf32, #tpu.memory_space<vmem>>) attributes {dimension_semantics = [#tpu.dimension_semantics<parallel>], iteration_bounds = array<i64: 1>, scalar_prefetch = 0 : i64, scratch_operands = 0 : i64, tpu.core_type = #tpu.core_type<tc>, window_params = [{transform_indices = @transform_0, window_bounds = array<i64: 16, 32>}, {pipeline_mode = #tpu.pipeline_mode<synchronous>, transform_indices = @transform_1, window_bounds = array<i64: 1, 32>}, {pipeline_mode = #tpu.pipeline_mode<synchronous>, transform_indices = @transform_2, window_bounds = array<i64: 1, 32>}, {transform_indices = @transform_3, window_bounds = array<i64: 16, 32>}]} {
    %c0 = arith.constant 0 : index
    %c0_0 = arith.constant 0 : index
    %0 = vector.load %arg1[%c0, %c0_0] : memref<16x32xf32, #tpu.memory_space<vmem>>, vector<16x32xf32>
    %cst = arith.constant dense<0.000000e+00> : vector<16xf32>
    %1 = vector.multi_reduction <add>, %0, %cst [1] : vector<16x32xf32> to vector<16xf32>
    %2 = vector.shape_cast %1 : vector<16xf32> to vector<16x1xf32>
    %cst_1 = arith.constant 3.200000e+01 : f32
    %3 = vector.broadcast %cst_1 : f32 to vector<16x1xf32>
    %4 = arith.divf %2, %3 : vector<16x1xf32>
    %5 = vector.broadcast %4 : vector<16x1xf32> to vector<16x32xf32>
    %6 = arith.subf %0, %5 : vector<16x32xf32>
    %7 = arith.mulf %6, %6 : vector<16x32xf32>
    %cst_2 = arith.constant dense<0.000000e+00> : vector<16xf32>
    %8 = vector.multi_reduction <add>, %7, %cst_2 [1] : vector<16x32xf32> to vector<16xf32>
    %9 = vector.shape_cast %8 : vector<16xf32> to vector<16x1xf32>
    %cst_3 = arith.constant 3.200000e+01 : f32
    %10 = vector.broadcast %cst_3 : f32 to vector<16x1xf32>
    %11 = arith.divf %9, %10 : vector<16x1xf32>
    %cst_4 = arith.constant 9.99999974E-6 : f32
    %12 = vector.broadcast %cst_4 : f32 to vector<16x1xf32>
    %13 = arith.addf %11, %12 : vector<16x1xf32>
    %14 = math.rsqrt %13 : vector<16x1xf32>
    %15 = vector.broadcast %14 : vector<16x1xf32> to vector<16x32xf32>
    %16 = arith.mulf %6, %15 : vector<16x32xf32>
    %c0_5 = arith.constant 0 : index
    %c0_6 = arith.constant 0 : index
    %17 = vector.load %arg2[%c0_5, %c0_6] : memref<1x32xf32, #tpu.memory_space<vmem>>, vector<1x32xf32>
    %18 = vector.broadcast %17 : vector<1x32xf32> to vector<16x32xf32>
    %19 = arith.mulf %16, %18 : vector<16x32xf32>
    %c0_7 = arith.constant 0 : index
    %c0_8 = arith.constant 0 : index
    %20 = vector.load %arg3[%c0_7, %c0_8] : memref<1x32xf32, #tpu.memory_space<vmem>>, vector<1x32xf32>
    %21 = vector.broadcast %20 : vector<1x32xf32> to vector<16x32xf32>
    %22 = arith.addf %19, %21 : vector<16x32xf32>
    %c0_9 = arith.constant 0 : index
    %c0_10 = arith.constant 0 : index
    %23 = vector.load %arg4[%c0_9, %c0_10] : memref<16x32xf32, #tpu.memory_space<vmem>>, vector<16x32xf32>
    tpu.vector_store %arg4[%c0_9, %c0_10], %22 {strides = array<i32>} : memref<16x32xf32, #tpu.memory_space<vmem>>, vector<16x32xf32>,
    return
  }
  func.func @transform_0(%arg0: i32) -> (i32, i32) {
    %c0_i32 = arith.constant 0 : i32
    %c0_i32_0 = arith.constant 0 : i32
    return %arg0, %c0_i32 : i32, i32
  }
  func.func @transform_1(%arg0: i32) -> (i32, i32) {
    %c0_i32 = arith.constant 0 : i32
    %c0_i32_0 = arith.constant 0 : i32
    %c0_i32_1 = arith.constant 0 : i32
    return %c0_i32, %c0_i32_0 : i32, i32
  }
  func.func @transform_2(%arg0: i32) -> (i32, i32) {
    %c0_i32 = arith.constant 0 : i32
    %c0_i32_0 = arith.constant 0 : i32
    %c0_i32_1 = arith.constant 0 : i32
    return %c0_i32, %c0_i32_0 : i32, i32
  }
  func.func @transform_3(%arg0: i32) -> (i32, i32) {
    %c0_i32 = arith.constant 0 : i32
    %c0_i32_0 = arith.constant 0 : i32
    return %arg0, %c0_i32 : i32, i32
  }
}

</mosaic_0001>

<llo_original>
// kernel: tpu_custom_call.1
$region0: #{tpu_custom_call.1}
  #allocation0 [shape = 'u32[]', space=smem, size = 0x4, offset = 0x4, fixed_abs, tag = 'smem constant byte address 0x4 - core index']
  #allocation1 [shape = 'u32[144,128]{1,0:T(1,128)}', space=vmem, size = 0x12000, scoped, tag = 'internal scratch']
  %s0 = inlined_call_operand.hbm [shape: f32[16,32], index: 0, kind: input, shape index: {}]
  %s1 = inlined_call_operand.vmem [shape: f32[1,32], index: 1, kind: input, shape index: {}]
  %s2 = inlined_call_operand.vmem [shape: f32[1,32], index: 2, kind: input, shape index: {}]
  %s3 = inlined_call_operand.hbm [shape: f32[16,32], index: 3, kind: output, shape index: {}]
  %s4 = sld [smem:[#allocation0]]
  $region26: #{tpu_custom_call.1} parent=0
    _
  %s6 = ssub.s32 1, %s4
  %s7 = scalar_select 0, %s6, %s4
  $region1: #{tpu_custom_call.1} parent=0
    #allocation2 [shape = 'u8[8192]{0}', space=vmem, size = 0x2000, scoped, tag = 'input window, operand 0, single buffered']
    #allocation3 [shape = 's32[1]{0}', space=sflag, size = 0x4, scoped, tag = 'scoped memory for tpu_custom_call.1']
    #allocation4 [shape = 's32[1]{0}', space=sflag, size = 0x4, scoped, tag = 'scoped memory for tpu_custom_call.1']
    #allocation5 [shape = 'u8[8192]{0}', space=vmem, size = 0x2000, scoped, tag = 'output window, operand 0, single buffered']
    %8 = vsyncpa [#allocation3], 0
    %9 = vsyncpa [#allocation4], 0
    // Predicated region
    $region2: #{tpu_custom_call.1} parent=1 // pred_check
      _
    $region3: #{tpu_custom_call.1} parent=1 // pred_check_branch
      %11 = sbr.rel (0) target = $region5
    $region4: #{tpu_custom_call.1} parent=1 // pred_region
      %s13 = ssub.s32 256, 256
      %14 = vsyncadd [#allocation3], %s13
      %s15 = sshll.u32 [#allocation2], 4
      %s16 = int_to_ptr.vmem [resolvable:$true] %s15
      %21 = dma.hbm_to_vmem [thread:$0]  %s0, 256, %s16, [#allocation3], 128, 128, 8
    $region5: #{tpu_custom_call.1} parent=1 // pred_fallthru
      _
    // Predicated region
    $region6: #{tpu_custom_call.1} parent=1 // pred_check
      _
    $region7: #{tpu_custom_call.1} parent=1 // pred_check_branch
      %23 = sbr.rel (0) target = $region9
    $region8: #{tpu_custom_call.1} parent=1 // pred_region
      _
    $region9: #{tpu_custom_call.1} parent=1 // pred_fallthru
      _
    // Predicated region
    $region10: #{tpu_custom_call.1} parent=1 // pred_check
      _
    $region11: #{tpu_custom_call.1} parent=1 // pred_check_branch
      %25 = sbr.rel (0) target = $region13
    $region12: #{tpu_custom_call.1} parent=1 // pred_region
      _
    $region13: #{tpu_custom_call.1} parent=1 // pred_fallthru
      _
    // Predicated region
    $region14: #{tpu_custom_call.1} parent=1 // pred_check
      _
    $region15: #{tpu_custom_call.1} parent=1 // pred_check_branch
      %27 = sbr.rel (0) target = $region17
    $region16: #{tpu_custom_call.1} parent=1 // pred_region
      %28 = dma.done [#allocation3], 256
    $region17: #{tpu_custom_call.1} parent=1 // pred_fallthru
      _
    %v29 = vld [vmem:[#allocation2] sm:$0xff]
    %v30 = vld [vmem:[#allocation2 + $0x8] sm:$0xff]
    %vm31 = vcmask 261120
    %v32 = vsel %vm31, %v29, 0.0
    %33 = vadd.xlane.f32.xlu0 %v32
    %v34 = vpop.xlane.xlu0 %33
    %v35 = vsel %vm31, %v30, 0.0
    %36 = vadd.xlane.f32.xlu0 %v35
    %v37 = vpop.xlane.xlu0 %36
    %v38 = vrcp.pop 32.0
    %v39 = vmul.f32 %v34, %v38
    %v40 = vmul.f32 %v37, %v38
    %v41 = vsub.f32 %v29, %v39
    %v42 = vsub.f32 %v30, %v40
    %v43 = vmul.f32 %v41, %v41
    %v44 = vmul.f32 %v42, %v42
    %v45 = vsel %vm31, %v43, 0.0
    %46 = vadd.xlane.f32.xlu0 %v45
    %v47 = vpop.xlane.xlu0 %46
    %v48 = vsel %vm31, %v44, 0.0
    %49 = vadd.xlane.f32.xlu0 %v48
    %v50 = vpop.xlane.xlu0 %49
    %v51 = vmul.f32 %v47, %v38
    %v52 = vmul.f32 %v50, %v38
    %v53 = vadd.f32 %v51, 1e-05
    %v54 = vadd.f32 %v52, 1e-05
    %v55 = vrsqrt.pop %v53
    %v56 = vrsqrt.pop %v54
    %v57 = vmul.f32 %v41, %v55
    %v58 = vmul.f32 %v42, %v56
    %v59 = vld [vmem:[%s1] sm:$0x1]
    %v61 = vlaneseq
    %v62 = vshrl.u32 %v61, 7
    %v63 = vsub.s32 0, %v62
    %v64 = vrot.slane %v59, %v63
    %v66 = vmul.f32 %v57, %v64
    %v67 = vmul.f32 %v58, %v64
    %v68 = vld [vmem:[%s2] sm:$0x1]
    %v70 = vlaneseq
    %v71 = vshrl.u32 %v70, 7
    %v72 = vsub.s32 0, %v71
    %v73 = vrot.slane %v68, %v72
    %v75 = vadd.f32 %v66, %v73
    %v76 = vadd.f32 %v67, %v73
    %77 = vst.msk [vmem:[#allocation5] sm:$0xff] %vm31, %v75
    %78 = vst.msk [vmem:[#allocation5 + $0x8] sm:$0xff] %vm31, %v76
    // Predicated region
    $region18: #{tpu_custom_call.1} parent=1 // pred_check
      _
    $region19: #{tpu_custom_call.1} parent=1 // pred_check_branch
      %80 = sbr.rel (0) target = $region21
    $region20: #{tpu_custom_call.1} parent=1 // pred_region
      %s82 = ssub.s32 256, 256
      %83 = vsyncadd [#allocation4], %s82
      %s84 = sshll.u32 [#allocation5], 4
      %s85 = int_to_ptr.vmem [resolvable:$true] %s84
      %90 = dma.vmem_to_hbm [thread:$0]  %s85, 256, %s3, [#allocation4], 128, 128, 8
    $region21: #{tpu_custom_call.1} parent=1 // pred_fallthru
      _
    // Predicated region
    $region22: #{tpu_custom_call.1} parent=1 // pred_check
      _
    $region23: #{tpu_custom_call.1} parent=1 // pred_check_branch
      %92 = sbr.rel (0) target = $region25
    $region24: #{tpu_custom_call.1} parent=1 // pred_region
      %93 = dma.done [#allocation4], 256
    $region25: #{tpu_custom_call.1} parent=1 // pred_fallthru
      _
    %94 = vsyncpa [#allocation3], 1
    %95 = vsyncpa [#allocation4], 1

</llo_original>
